<compile_context>
chip_gen: v7x
topology: tpu7x:2x2x1
jax: 0.10.0
libtpu: 0.0.40
codegen_flags: <defaults>
</compile_context>

<pallas_src>
import jax
import jax.numpy as jnp
from jax import lax
from jax.experimental import pallas as pl
from jax.experimental.pallas import tpu as pltpu

EMB = 128        # embedding dim (multiple of 128 -> lane-dense)
DEPTH = 4        # number of EqualLinear + LeakyReLU layers
LR_MUL = 0.1
NEG_SLOPE = 0.2
EPS = 1e-12      # F.normalize default eps


def style_vectorizer_kernel(x_ref, w_ref, b_ref, o_ref):
    # Load the full (B, E) block; keep elementwise math in f32 on all chips
    # (v5e VPU/EUP have no bf16 path).
    x = x_ref[...].astype(jnp.float32)

    # F.normalize(x, dim=1): x * rsqrt(max(||x||^2, eps^2))  (EUP rsqrt, no divide).
    sq = jnp.sum(x * x, axis=1, keepdims=True)
    inv_norm = lax.rsqrt(jnp.maximum(sq, EPS * EPS))
    x = x * inv_norm

    depth = w_ref.shape[0]
    mm_dtype = w_ref.dtype  # bf16 (fast path) or f32

    # Sequential EqualLinear + LeakyReLU chain (depth is small & static -> unrolled).
    # lr_mul is already folded into w_ref / b_ref at parameter-prep time.
    for d in range(depth):
        w = w_ref[d]                # (E_out, E_in), torch (out, in) convention
        b = b_ref[pl.ds(d, 1), :]   # (1, E_out), f32
        # x @ w.T without the transpose: contract x's dim 1 against w's dim 1.
        y = lax.dot_general(
            x.astype(mm_dtype), w,
            dimension_numbers=(((1,), (1,)), ((), ())),
            preferred_element_type=jnp.float32)
        y = y + b
        x = jnp.maximum(y, NEG_SLOPE * y)   # leaky ReLU (0 < slope < 1)

    o_ref[...] = x.astype(o_ref.dtype)


def prepare_params(weights, biases, lr_mul=LR_MUL, matmul_dtype=jnp.bfloat16):
    """One-time parameter transform (reused across calls, not per-call prescale):
    fold lr_mul into weights/biases and cast weights to the matmul dtype."""
    w = (weights.astype(jnp.float32) * lr_mul).astype(matmul_dtype)
    b = biases.astype(jnp.float32) * lr_mul      # biases stay f32 (added post f32-acc)
    return w, b


def style_vectorizer(x, w_folded, b_folded):
    """x: (B, E); w_folded: (DEPTH, E, E) bf16/f32 with lr_mul folded;
    b_folded: (DEPTH, E) f32 with lr_mul folded."""
    B, E = x.shape
    depth = w_folded.shape[0]

    flops = 2 * B * E * E * depth + 4 * B * E            # matmuls + normalize/lrelu
    bytes_accessed = (w_folded.size * w_folded.dtype.itemsize
                      + b_folded.size * b_folded.dtype.itemsize
                      + 2 * x.size * x.dtype.itemsize)

    return pl.pallas_call(
        style_vectorizer_kernel,
        out_shape=jax.ShapeDtypeStruct((B, E), x.dtype),
        grid_spec=pltpu.PrefetchScalarGridSpec(
            num_scalar_prefetch=0,
            grid=(1,),
            in_specs=[
                pl.BlockSpec((B, E), lambda i: (0, 0)),
                pl.BlockSpec((depth, E, E), lambda i: (0, 0, 0)),
                pl.BlockSpec((depth, E), lambda i: (0, 0)),
            ],
            out_specs=pl.BlockSpec((B, E), lambda i: (0, 0)),
        ),
        compiler_params=pltpu.CompilerParams(
            dimension_semantics=("arbitrary",)),
        cost_estimate=pl.CostEstimate(
            flops=flops, transcendentals=B, bytes_accessed=bytes_accessed),
    )(x, w_folded, b_folded)


def reference(x, weights, biases, lr_mul=LR_MUL):
    """Pure-JAX f32 reference matching the PyTorch module exactly."""
    x = x.astype(jnp.float32)
    norm = jnp.sqrt(jnp.sum(x * x, axis=1, keepdims=True))
    x = x / jnp.maximum(norm, EPS)
    for d in range(weights.shape[0]):
        y = x @ (weights[d].astype(jnp.float32) * lr_mul).T + biases[d] * lr_mul
        x = jnp.where(y >= 0.0, y, NEG_SLOPE * y)
    return x


if __name__ == "__main__":
    key = jax.random.PRNGKey(0)
    kx, kw = jax.random.split(key)

    batch = 8
    x = jax.random.normal(kx, (batch, EMB), dtype=jnp.float32)

    # Deterministic parameter init matching EqualLinear.__init__:
    #   weight = randn(out_dim, in_dim), bias = zeros(out_dim)
    weights = jax.random.normal(kw, (DEPTH, EMB, EMB), dtype=jnp.float32)
    biases = jnp.zeros((DEPTH, EMB), dtype=jnp.float32)

    ref = reference(x, weights, biases)

    # 1) Exact-semantics check: f32 weights path must match the PyTorch math tightly.
    w32, b32 = prepare_params(weights, biases, matmul_dtype=jnp.float32)
    out_f32 = jax.block_until_ready(style_vectorizer(x, w32, b32))
    assert out_f32.shape == (batch, EMB)
    assert jnp.allclose(out_f32, ref, atol=1e-4, rtol=1e-4)

    # 2) Fast path: bf16 weights / bf16 LHS with f32 accumulation (halves weight
    #    HBM bytes). Looser tolerance accounts for bf16 rounding of the operands.
    wbf, bbf = prepare_params(weights, biases, matmul_dtype=jnp.bfloat16)
    out_bf16 = jax.block_until_ready(style_vectorizer(x, wbf, bbf))
    assert out_bf16.shape == (batch, EMB)
    assert jnp.allclose(out_bf16, ref, atol=2e-2, rtol=2e-2)

    print("KERNEL_OK")
</pallas_src>

<mosaic_0001>
module attributes {stable_mosaic.version = 11 : i64} {
  func.func @style_vectorizer_kernel(%arg0: i32, %arg1: memref<8x128xf32, #tpu.memory_space<vmem>>, %arg2: memref<4x128x128xf32, #tpu.memory_space<vmem>>, %arg3: memref<4x128xf32, #tpu.memory_space<vmem>>, %arg4: memref<8x128xf32, #tpu.memory_space<vmem>>) attributes {dimension_semantics = [#tpu.dimension_semantics<arbitrary>], iteration_bounds = array<i64: 1>, scalar_prefetch = 0 : i64, scratch_operands = 0 : i64, tpu.core_type = #tpu.core_type<tc>, window_params = [{pipeline_mode = #tpu.pipeline_mode<synchronous>, transform_indices = @transform_0, window_bounds = array<i64: 8, 128>}, {pipeline_mode = #tpu.pipeline_mode<synchronous>, transform_indices = @transform_1, window_bounds = array<i64: 4, 128, 128>}, {pipeline_mode = #tpu.pipeline_mode<synchronous>, transform_indices = @transform_2, window_bounds = array<i64: 4, 128>}, {pipeline_mode = #tpu.pipeline_mode<synchronous>, transform_indices = @transform_3, window_bounds = array<i64: 8, 128>}]} {
    %c0 = arith.constant 0 : index
    %c0_0 = arith.constant 0 : index
    %0 = vector.load %arg1[%c0, %c0_0] : memref<8x128xf32, #tpu.memory_space<vmem>>, vector<8x128xf32>
    %1 = arith.mulf %0, %0 : vector<8x128xf32>
    %cst = arith.constant dense<0.000000e+00> : vector<8xf32>
    %2 = vector.multi_reduction <add>, %1, %cst [1] : vector<8x128xf32> to vector<8xf32>
    %3 = vector.shape_cast %2 : vector<8xf32> to vector<8x1xf32>
    %cst_1 = arith.constant 1.000000e-24 : f32
    %4 = vector.broadcast %cst_1 : f32 to vector<8x1xf32>
    %5 = arith.maximumf %3, %4 : vector<8x1xf32>
    %6 = math.rsqrt %5 : vector<8x1xf32>
    %7 = vector.broadcast %6 : vector<8x1xf32> to vector<8x128xf32>
    %8 = arith.mulf %0, %7 : vector<8x128xf32>
    %c0_2 = arith.constant 0 : index
    %c0_3 = arith.constant 0 : index
    %c0_4 = arith.constant 0 : index
    %9 = vector.load %arg2[%c0_2, %c0_3, %c0_4] : memref<4x128x128xf32, #tpu.memory_space<vmem>>, vector<1x128x128xf32>
    %10 = vector.shape_cast %9 : vector<1x128x128xf32> to vector<128x128xf32>
    %c0_5 = arith.constant 0 : index
    %c0_6 = arith.constant 0 : index
    %11 = vector.load %arg3[%c0_5, %c0_6] : memref<4x128xf32, #tpu.memory_space<vmem>>, vector<1x128xf32>
    %cst_7 = arith.constant dense<0.000000e+00> : vector<8x128xf32>
    %12 = tpu.matmul %8, %10, %cst_7 {dimension_numbers = #tpu.dot_dimension_numbers<[1], [1], [0], [0], [0, 0, 1, 0], [], []>} : vector<8x128xf32>, vector<128x128xf32>, vector<8x128xf32> -> vector<8x128xf32>
    %13 = vector.broadcast %11 : vector<1x128xf32> to vector<8x128xf32>
    %14 = arith.addf %12, %13 : vector<8x128xf32>
    %cst_8 = arith.constant 2.000000e-01 : f32
    %15 = vector.broadcast %cst_8 : f32 to vector<8x128xf32>
    %16 = arith.mulf %15, %14 : vector<8x128xf32>
    %17 = arith.maximumf %14, %16 : vector<8x128xf32>
    %c1 = arith.constant 1 : index
    %c0_9 = arith.constant 0 : index
    %c0_10 = arith.constant 0 : index
    %18 = vector.load %arg2[%c1, %c0_9, %c0_10] : memref<4x128x128xf32, #tpu.memory_space<vmem>>, vector<1x128x128xf32>
    %19 = vector.shape_cast %18 : vector<1x128x128xf32> to vector<128x128xf32>
    %c1_11 = arith.constant 1 : index
    %c0_12 = arith.constant 0 : index
    %20 = vector.load %arg3[%c1_11, %c0_12] : memref<4x128xf32, #tpu.memory_space<vmem>>, vector<1x128xf32>
    %cst_13 = arith.constant dense<0.000000e+00> : vector<8x128xf32>
    %21 = tpu.matmul %17, %19, %cst_13 {dimension_numbers = #tpu.dot_dimension_numbers<[1], [1], [0], [0], [0, 0, 1, 0], [], []>} : vector<8x128xf32>, vector<128x128xf32>, vector<8x128xf32> -> vector<8x128xf32>
    %22 = vector.broadcast %20 : vector<1x128xf32> to vector<8x128xf32>
    %23 = arith.addf %21, %22 : vector<8x128xf32>
    %cst_14 = arith.constant 2.000000e-01 : f32
    %24 = vector.broadcast %cst_14 : f32 to vector<8x128xf32>
    %25 = arith.mulf %24, %23 : vector<8x128xf32>
    %26 = arith.maximumf %23, %25 : vector<8x128xf32>
    %c2 = arith.constant 2 : index
    %c0_15 = arith.constant 0 : index
    %c0_16 = arith.constant 0 : index
    %27 = vector.load %arg2[%c2, %c0_15, %c0_16] : memref<4x128x128xf32, #tpu.memory_space<vmem>>, vector<1x128x128xf32>
    %28 = vector.shape_cast %27 : vector<1x128x128xf32> to vector<128x128xf32>
    %c2_17 = arith.constant 2 : index
    %c0_18 = arith.constant 0 : index
    %29 = vector.load %arg3[%c2_17, %c0_18] : memref<4x128xf32, #tpu.memory_space<vmem>>, vector<1x128xf32>
    %cst_19 = arith.constant dense<0.000000e+00> : vector<8x128xf32>
    %30 = tpu.matmul %26, %28, %cst_19 {dimension_numbers = #tpu.dot_dimension_numbers<[1], [1], [0], [0], [0, 0, 1, 0], [], []>} : vector<8x128xf32>, vector<128x128xf32>, vector<8x128xf32> -> vector<8x128xf32>
    %31 = vector.broadcast %29 : vector<1x128xf32> to vector<8x128xf32>
    %32 = arith.addf %30, %31 : vector<8x128xf32>
    %cst_20 = arith.constant 2.000000e-01 : f32
    %33 = vector.broadcast %cst_20 : f32 to vector<8x128xf32>
    %34 = arith.mulf %33, %32 : vector<8x128xf32>
    %35 = arith.maximumf %32, %34 : vector<8x128xf32>
    %c3 = arith.constant 3 : index
    %c0_21 = arith.constant 0 : index
    %c0_22 = arith.constant 0 : index
    %36 = vector.load %arg2[%c3, %c0_21, %c0_22] : memref<4x128x128xf32, #tpu.memory_space<vmem>>, vector<1x128x128xf32>
    %37 = vector.shape_cast %36 : vector<1x128x128xf32> to vector<128x128xf32>
    %c3_23 = arith.constant 3 : index
    %c0_24 = arith.constant 0 : index
    %38 = vector.load %arg3[%c3_23, %c0_24] : memref<4x128xf32, #tpu.memory_space<vmem>>, vector<1x128xf32>
    %cst_25 = arith.constant dense<0.000000e+00> : vector<8x128xf32>
    %39 = tpu.matmul %35, %37, %cst_25 {dimension_numbers = #tpu.dot_dimension_numbers<[1], [1], [0], [0], [0, 0, 1, 0], [], []>} : vector<8x128xf32>, vector<128x128xf32>, vector<8x128xf32> -> vector<8x128xf32>
    %40 = vector.broadcast %38 : vector<1x128xf32> to vector<8x128xf32>
    %41 = arith.addf %39, %40 : vector<8x128xf32>
    %cst_26 = arith.constant 2.000000e-01 : f32
    %42 = vector.broadcast %cst_26 : f32 to vector<8x128xf32>
    %43 = arith.mulf %42, %41 : vector<8x128xf32>
    %44 = arith.maximumf %41, %43 : vector<8x128xf32>
    %c0_27 = arith.constant 0 : index
    %c0_28 = arith.constant 0 : index
    %45 = vector.load %arg4[%c0_27, %c0_28] : memref<8x128xf32, #tpu.memory_space<vmem>>, vector<8x128xf32>
    tpu.vector_store %arg4[%c0_27, %c0_28], %44 {strides = array<i32>} : memref<8x128xf32, #tpu.memory_space<vmem>>, vector<8x128xf32>,
    return
  }
  func.func @transform_0(%arg0: i32) -> (i32, i32) {
    %c0_i32 = arith.constant 0 : i32
    %c0_i32_0 = arith.constant 0 : i32
    %c0_i32_1 = arith.constant 0 : i32
    return %c0_i32, %c0_i32_0 : i32, i32
  }
  func.func @transform_1(%arg0: i32) -> (i32, i32, i32) {
    %c0_i32 = arith.constant 0 : i32
    %c0_i32_0 = arith.constant 0 : i32
    %c0_i32_1 = arith.constant 0 : i32
    %c0_i32_2 = arith.constant 0 : i32
    return %c0_i32, %c0_i32_0, %c0_i32_1 : i32, i32, i32
  }
  func.func @transform_2(%arg0: i32) -> (i32, i32) {
    %c0_i32 = arith.constant 0 : i32
    %c0_i32_0 = arith.constant 0 : i32
    %c0_i32_1 = arith.constant 0 : i32
    return %c0_i32, %c0_i32_0 : i32, i32
  }
  func.func @transform_3(%arg0: i32) -> (i32, i32) {
    %c0_i32 = arith.constant 0 : i32
    %c0_i32_0 = arith.constant 0 : i32
    %c0_i32_1 = arith.constant 0 : i32
    return %c0_i32, %c0_i32_0 : i32, i32
  }
}

</mosaic_0001>

<llo_original>
// kernel: tpu_custom_call.1
$region0: #{tpu_custom_call.1}
  #allocation0 [shape = 'u32[]', space=smem, size = 0x4, offset = 0x4, fixed_abs, tag = 'smem constant byte address 0x4 - core index']
  #allocation1 [shape = 'u32[144,128]{1,0:T(1,128)}', space=vmem, size = 0x12000, scoped, tag = 'internal scratch']
  %s0 = inlined_call_operand.hbm [shape: f32[8,128], index: 0, kind: input, shape index: {}]
  %s1 = inlined_call_operand.hbm [shape: f32[4,128,128], index: 1, kind: input, shape index: {}]
  %s2 = inlined_call_operand.vmem [shape: f32[4,128], index: 2, kind: input, shape index: {}]
  %s3 = inlined_call_operand.hbm [shape: f32[8,128], index: 3, kind: output, shape index: {}]
  %s4 = sld [smem:[#allocation0]]
  $region30: #{tpu_custom_call.1} parent=0
    _
  %s6 = ssub.s32 1, %s4
  %s7 = scalar_select 0, %s6, %s4
  $region1: #{tpu_custom_call.1} parent=0
    #allocation2 [shape = 'u8[4096]{0}', space=vmem, size = 0x1000, scoped, tag = 'input window, operand 0, single buffered']
    #allocation3 [shape = 's32[1]{0}', space=sflag, size = 0x4, scoped, tag = 'scoped memory for tpu_custom_call.1']
    #allocation4 [shape = 's32[1]{0}', space=sflag, size = 0x4, scoped, tag = 'scoped memory for tpu_custom_call.1']
    #allocation5 [shape = 'u8[262144]{0}', space=vmem, size = 0x40000, scoped, tag = 'input window, operand 1, single buffered']
    #allocation6 [shape = 's32[1]{0}', space=sflag, size = 0x4, scoped, tag = 'scoped memory for tpu_custom_call.1']
    #allocation7 [shape = 'u8[4096]{0}', space=vmem, size = 0x1000, scoped, tag = 'output window, operand 0, single buffered']
    %8 = vsyncpa [#allocation3], 0
    %9 = vsyncpa [#allocation6], 0
    %10 = vsyncpa [#allocation4], 0
    // Predicated region
    $region2: #{tpu_custom_call.1} parent=1 // pred_check
      _
    $region3: #{tpu_custom_call.1} parent=1 // pred_check_branch
      %12 = sbr.rel (0) target = $region5
    $region4: #{tpu_custom_call.1} parent=1 // pred_region
      %s14 = ssub.s32 128, 128
      %15 = vsyncadd [#allocation3], %s14
      %s17 = sshll.u32 [#allocation2], 4
      %s18 = int_to_ptr.vmem [resolvable:$true] %s17
      %20 = dma.hbm_to_vmem [thread:$0]  %s0, 128, %s18, [#allocation3]
    $region5: #{tpu_custom_call.1} parent=1 // pred_fallthru
      _
    // Predicated region
    $region6: #{tpu_custom_call.1} parent=1 // pred_check
      _
    $region7: #{tpu_custom_call.1} parent=1 // pred_check_branch
      %22 = sbr.rel (0) target = $region9
    $region8: #{tpu_custom_call.1} parent=1 // pred_region
      %s24 = ssub.s32 8192, 8192
      %25 = vsyncadd [#allocation6], %s24
      %s26 = sshll.u32 [#allocation5], 4
      %s27 = int_to_ptr.vmem [resolvable:$true] %s26
      %32 = dma.hbm_to_vmem [thread:$0]  %s1, 8192, %s27, [#allocation6], 128, 128, 8
    $region9: #{tpu_custom_call.1} parent=1 // pred_fallthru
      _
    // Predicated region
    $region10: #{tpu_custom_call.1} parent=1 // pred_check
      _
    $region11: #{tpu_custom_call.1} parent=1 // pred_check_branch
      %34 = sbr.rel (0) target = $region13
    $region12: #{tpu_custom_call.1} parent=1 // pred_region
      _
    $region13: #{tpu_custom_call.1} parent=1 // pred_fallthru
      _
    // Predicated region
    $region14: #{tpu_custom_call.1} parent=1 // pred_check
      _
    $region15: #{tpu_custom_call.1} parent=1 // pred_check_branch
      %36 = sbr.rel (0) target = $region17
    $region16: #{tpu_custom_call.1} parent=1 // pred_region
      %37 = dma.done [#allocation3], 128
    $region17: #{tpu_custom_call.1} parent=1 // pred_fallthru
      _
    // Predicated region
    $region18: #{tpu_custom_call.1} parent=1 // pred_check
      _
    $region19: #{tpu_custom_call.1} parent=1 // pred_check_branch
      %39 = sbr.rel (0) target = $region21
    $region20: #{tpu_custom_call.1} parent=1 // pred_region
      %40 = dma.done [#allocation6], 8192
    $region21: #{tpu_custom_call.1} parent=1 // pred_fallthru
      _
    %v41 = vld [vmem:[#allocation2] sm:$0xff]
    %v42 = vmul.f32 %v41, %v41
    %43 = vadd.xlane.f32.xlu0 %v42
    %v44 = vpop.xlane.xlu0 %43
    %v45 = vmax.f32 %v44, 1e-24
    %v46 = vrsqrt.pop %v45
    %v47 = vmul.f32 %v41, %v46
    %v48 = vld [vmem:[#allocation5] sm:$0xff]
    %v49 = vld [vmem:[#allocation5 + $0x8] sm:$0xff]
    %v50 = vld [vmem:[#allocation5 + $0x10] sm:$0xff]
    %v51 = vld [vmem:[#allocation5 + $0x18] sm:$0xff]
    %v52 = vld [vmem:[#allocation5 + $0x20] sm:$0xff]
    %v53 = vld [vmem:[#allocation5 + $0x28] sm:$0xff]
    %v54 = vld [vmem:[#allocation5 + $0x30] sm:$0xff]
    %v55 = vld [vmem:[#allocation5 + $0x38] sm:$0xff]
    %v56 = vld [vmem:[#allocation5 + $0x40] sm:$0xff]
    %v57 = vld [vmem:[#allocation5 + $0x48] sm:$0xff]
    %v58 = vld [vmem:[#allocation5 + $0x50] sm:$0xff]
    %v59 = vld [vmem:[#allocation5 + $0x58] sm:$0xff]
    %v60 = vld [vmem:[#allocation5 + $0x60] sm:$0xff]
    %v61 = vld [vmem:[#allocation5 + $0x68] sm:$0xff]
    %v62 = vld [vmem:[#allocation5 + $0x70] sm:$0xff]
    %v63 = vld [vmem:[#allocation5 + $0x78] sm:$0xff]
    %v64 = vld [vmem:[%s2] sm:$0x1]
    %v65 = vlaneseq
    %v66 = vshrl.u32 %v65, 7
    %v67 = vsub.s32 0, %v66
    %v68 = vrot.slane %v64, %v67
    %69 = vmatprep.subr.mxu0 0.0
    %70 = vmatpush1.xpose.msra.mxu0 %v48
    %71 = vmatprep.subr.mxu0 0.0
    %72 = vmatpush1.xpose.msra.mxu0 %v49
    %73 = vmatprep.subr.mxu0 0.0
    %74 = vmatpush1.xpose.msra.mxu0 %v50
    %75 = vmatprep.subr.mxu0 0.0
    %76 = vmatpush1.xpose.msra.mxu0 %v51
    %77 = vmatprep.subr.mxu0 0.0
    %78 = vmatpush1.xpose.msra.mxu0 %v52
    %79 = vmatprep.subr.mxu0 0.0
    %80 = vmatpush1.xpose.msra.mxu0 %v53
    %81 = vmatprep.subr.mxu0 0.0
    %82 = vmatpush1.xpose.msra.mxu0 %v54
    %83 = vmatprep.subr.mxu0 0.0
    %84 = vmatpush1.xpose.msra.mxu0 %v55
    %85 = vmatprep.subr.mxu0 0.0
    %86 = vmatpush1.xpose.msra.mxu0 %v56
    %87 = vmatprep.subr.mxu0 0.0
    %88 = vmatpush1.xpose.msra.mxu0 %v57
    %89 = vmatprep.subr.mxu0 0.0
    %90 = vmatpush1.xpose.msra.mxu0 %v58
    %91 = vmatprep.subr.mxu0 0.0
    %92 = vmatpush1.xpose.msra.mxu0 %v59
    %93 = vmatprep.subr.mxu0 0.0
    %94 = vmatpush1.xpose.msra.mxu0 %v60
    %95 = vmatprep.subr.mxu0 0.0
    %96 = vmatpush1.xpose.msra.mxu0 %v61
    %97 = vmatprep.subr.mxu0 0.0
    %98 = vmatpush1.xpose.msra.mxu0 %v62
    %99 = vmatprep.subr.mxu0 0.0
    %100 = vmatpush1.xpose.msra.mxu0 %v63
    %101 = vmatprep.subr.mxu0 0.0
    %102 = vmatpush1.xpose.msra.mxu0 0.0
    %103 = vmatprep.subr.mxu0 0.0
    %104 = vmatpush1.xpose.msra.mxu0 0.0
    %105 = vmatprep.subr.mxu0 0.0
    %106 = vmatpush1.xpose.msra.mxu0 0.0
    %107 = vmatprep.subr.mxu0 0.0
    %108 = vmatpush1.xpose.msra.mxu0 0.0
    %109 = vmatprep.subr.mxu0 0.0
    %110 = vmatpush1.xpose.msra.mxu0 0.0
    %111 = vmatprep.subr.mxu0 0.0
    %112 = vmatpush1.xpose.msra.mxu0 0.0
    %113 = vmatprep.subr.mxu0 0.0
    %114 = vmatpush1.xpose.msra.mxu0 0.0
    %115 = vmatprep.subr.mxu0 0.0
    %116 = vmatpush1.xpose.msra.mxu0 0.0
    %117 = vmatprep.subr.mxu0 0.0
    %118 = vmatpush1.xpose.msra.mxu0 0.0
    %119 = vmatprep.subr.mxu0 0.0
    %120 = vmatpush1.xpose.msra.mxu0 0.0
    %121 = vmatprep.subr.mxu0 0.0
    %122 = vmatpush1.xpose.msra.mxu0 0.0
    %123 = vmatprep.subr.mxu0 0.0
    %124 = vmatpush1.xpose.msra.mxu0 0.0
    %125 = vmatprep.subr.mxu0 0.0
    %126 = vmatpush1.xpose.msra.mxu0 0.0
    %127 = vmatprep.subr.mxu0 0.0
    %128 = vmatpush1.xpose.msra.mxu0 0.0
    %129 = vmatprep.subr.mxu0 0.0
    %130 = vmatpush1.xpose.msra.mxu0 0.0
    %131 = vmatprep.subr.mxu0 0.0
    %132 = vmatpush1.xpose.msra.mxu0 0.0
    %133 = vmatprep.mubr.f32.mxu0 0.0
    %134 = vmatmul.mubr.f32.gmra.mrb[0].mxu0 %v47
    %v135 = vpop.f32.mrb[0].mxu0
    %v136 = vadd.f32 %v68, %v135
    %v137 = vpop.f32.mrb[0].mxu0
    %138 = vdwg.mxu0
    %v139 = vmul.f32 %v136, 0.2
    %v140 = vmax.f32 %v136, %v139
    %s141 = scalar_lea.vmem [#allocation5], 128
    %v142 = vld [vmem:[%s141] sm:$0xff]
    %v143 = vld [vmem:[%s141 + $0x8] sm:$0xff]
    %v144 = vld [vmem:[%s141 + $0x10] sm:$0xff]
    %v145 = vld [vmem:[%s141 + $0x18] sm:$0xff]
    %v146 = vld [vmem:[%s141 + $0x20] sm:$0xff]
    %v147 = vld [vmem:[%s141 + $0x28] sm:$0xff]
    %v148 = vld [vmem:[%s141 + $0x30] sm:$0xff]
    %v149 = vld [vmem:[%s141 + $0x38] sm:$0xff]
    %v150 = vld [vmem:[%s141 + $0x40] sm:$0xff]
    %v151 = vld [vmem:[%s141 + $0x48] sm:$0xff]
    %v152 = vld [vmem:[%s141 + $0x50] sm:$0xff]
    %v153 = vld [vmem:[%s141 + $0x58] sm:$0xff]
    %v154 = vld [vmem:[%s141 + $0x60] sm:$0xff]
    %v155 = vld [vmem:[%s141 + $0x68] sm:$0xff]
    %v156 = vld [vmem:[%s141 + $0x70] sm:$0xff]
    %v157 = vld [vmem:[%s141 + $0x78] sm:$0xff]
    %v158 = vld [vmem:[%s2 + $0x1] sm:$0x1]
    %v159 = vlaneseq
    %v160 = vshrl.u32 %v159, 7
    %v161 = vsub.s32 0, %v160
    %v162 = vrot.slane %v158, %v161
    %163 = vmatprep.subr.mxu0 0.0
    %164 = vmatpush1.xpose.msra.mxu0 %v142
    %165 = vmatprep.subr.mxu0 0.0
    %166 = vmatpush1.xpose.msra.mxu0 %v143
    %167 = vmatprep.subr.mxu0 0.0
    %168 = vmatpush1.xpose.msra.mxu0 %v144
    %169 = vmatprep.subr.mxu0 0.0
    %170 = vmatpush1.xpose.msra.mxu0 %v145
    %171 = vmatprep.subr.mxu0 0.0
    %172 = vmatpush1.xpose.msra.mxu0 %v146
    %173 = vmatprep.subr.mxu0 0.0
    %174 = vmatpush1.xpose.msra.mxu0 %v147
    %175 = vmatprep.subr.mxu0 0.0
    %176 = vmatpush1.xpose.msra.mxu0 %v148
    %177 = vmatprep.subr.mxu0 0.0
    %178 = vmatpush1.xpose.msra.mxu0 %v149
    %179 = vmatprep.subr.mxu0 0.0
    %180 = vmatpush1.xpose.msra.mxu0 %v150
    %181 = vmatprep.subr.mxu0 0.0
    %182 = vmatpush1.xpose.msra.mxu0 %v151
    %183 = vmatprep.subr.mxu0 0.0
    %184 = vmatpush1.xpose.msra.mxu0 %v152
    %185 = vmatprep.subr.mxu0 0.0
    %186 = vmatpush1.xpose.msra.mxu0 %v153
    %187 = vmatprep.subr.mxu0 0.0
    %188 = vmatpush1.xpose.msra.mxu0 %v154
    %189 = vmatprep.subr.mxu0 0.0
    %190 = vmatpush1.xpose.msra.mxu0 %v155
    %191 = vmatprep.subr.mxu0 0.0
    %192 = vmatpush1.xpose.msra.mxu0 %v156
    %193 = vmatprep.subr.mxu0 0.0
    %194 = vmatpush1.xpose.msra.mxu0 %v157
    %195 = vmatprep.subr.mxu0 0.0
    %196 = vmatpush1.xpose.msra.mxu0 0.0
    %197 = vmatprep.subr.mxu0 0.0
    %198 = vmatpush1.xpose.msra.mxu0 0.0
    %199 = vmatprep.subr.mxu0 0.0
    %200 = vmatpush1.xpose.msra.mxu0 0.0
    %201 = vmatprep.subr.mxu0 0.0
    %202 = vmatpush1.xpose.msra.mxu0 0.0
    %203 = vmatprep.subr.mxu0 0.0
    %204 = vmatpush1.xpose.msra.mxu0 0.0
    %205 = vmatprep.subr.mxu0 0.0
    %206 = vmatpush1.xpose.msra.mxu0 0.0
    %207 = vmatprep.subr.mxu0 0.0
    %208 = vmatpush1.xpose.msra.mxu0 0.0
    %209 = vmatprep.subr.mxu0 0.0
    %210 = vmatpush1.xpose.msra.mxu0 0.0
    %211 = vmatprep.subr.mxu0 0.0
    %212 = vmatpush1.xpose.msra.mxu0 0.0
    %213 = vmatprep.subr.mxu0 0.0
    %214 = vmatpush1.xpose.msra.mxu0 0.0
    %215 = vmatprep.subr.mxu0 0.0
    %216 = vmatpush1.xpose.msra.mxu0 0.0
    %217 = vmatprep.subr.mxu0 0.0
    %218 = vmatpush1.xpose.msra.mxu0 0.0
    %219 = vmatprep.subr.mxu0 0.0
    %220 = vmatpush1.xpose.msra.mxu0 0.0
    %221 = vmatprep.subr.mxu0 0.0
    %222 = vmatpush1.xpose.msra.mxu0 0.0
    %223 = vmatprep.subr.mxu0 0.0
    %224 = vmatpush1.xpose.msra.mxu0 0.0
    %225 = vmatprep.subr.mxu0 0.0
    %226 = vmatpush1.xpose.msra.mxu0 0.0
    %227 = vmatprep.mubr.f32.mxu0 0.0
    %228 = vmatmul.mubr.f32.gmra.mrb[0].mxu0 %v140
    %v229 = vpop.f32.mrb[0].mxu0
    %v230 = vadd.f32 %v162, %v229
    %v231 = vpop.f32.mrb[0].mxu0
    %232 = vdwg.mxu0
    %v233 = vmul.f32 %v230, 0.2
    %v234 = vmax.f32 %v230, %v233
    %s235 = scalar_lea.vmem [#allocation5], 256
    %v236 = vld [vmem:[%s235] sm:$0xff]
    %v237 = vld [vmem:[%s235 + $0x8] sm:$0xff]
    %v238 = vld [vmem:[%s235 + $0x10] sm:$0xff]
    %v239 = vld [vmem:[%s235 + $0x18] sm:$0xff]
    %v240 = vld [vmem:[%s235 + $0x20] sm:$0xff]
    %v241 = vld [vmem:[%s235 + $0x28] sm:$0xff]
    %v242 = vld [vmem:[%s235 + $0x30] sm:$0xff]
    %v243 = vld [vmem:[%s235 + $0x38] sm:$0xff]
    %v244 = vld [vmem:[%s235 + $0x40] sm:$0xff]
    %v245 = vld [vmem:[%s235 + $0x48] sm:$0xff]
    %v246 = vld [vmem:[%s235 + $0x50] sm:$0xff]
    %v247 = vld [vmem:[%s235 + $0x58] sm:$0xff]
    %v248 = vld [vmem:[%s235 + $0x60] sm:$0xff]
    %v249 = vld [vmem:[%s235 + $0x68] sm:$0xff]
    %v250 = vld [vmem:[%s235 + $0x70] sm:$0xff]
    %v251 = vld [vmem:[%s235 + $0x78] sm:$0xff]
    %v252 = vld [vmem:[%s2 + $0x2] sm:$0x1]
    %v253 = vlaneseq
    %v254 = vshrl.u32 %v253, 7
    %v255 = vsub.s32 0, %v254
    %v256 = vrot.slane %v252, %v255
    %257 = vmatprep.subr.mxu0 0.0
    %258 = vmatpush1.xpose.msra.mxu0 %v236
    %259 = vmatprep.subr.mxu0 0.0
    %260 = vmatpush1.xpose.msra.mxu0 %v237
    %261 = vmatprep.subr.mxu0 0.0
    %262 = vmatpush1.xpose.msra.mxu0 %v238
    %263 = vmatprep.subr.mxu0 0.0
    %264 = vmatpush1.xpose.msra.mxu0 %v239
    %265 = vmatprep.subr.mxu0 0.0
    %266 = vmatpush1.xpose.msra.mxu0 %v240
    %267 = vmatprep.subr.mxu0 0.0
    %268 = vmatpush1.xpose.msra.mxu0 %v241
    %269 = vmatprep.subr.mxu0 0.0
    %270 = vmatpush1.xpose.msra.mxu0 %v242
    %271 = vmatprep.subr.mxu0 0.0
    %272 = vmatpush1.xpose.msra.mxu0 %v243
    %273 = vmatprep.subr.mxu0 0.0
    %274 = vmatpush1.xpose.msra.mxu0 %v244
    %275 = vmatprep.subr.mxu0 0.0
    %276 = vmatpush1.xpose.msra.mxu0 %v245
    %277 = vmatprep.subr.mxu0 0.0
    %278 = vmatpush1.xpose.msra.mxu0 %v246
    %279 = vmatprep.subr.mxu0 0.0
    %280 = vmatpush1.xpose.msra.mxu0 %v247
    %281 = vmatprep.subr.mxu0 0.0
    %282 = vmatpush1.xpose.msra.mxu0 %v248
    %283 = vmatprep.subr.mxu0 0.0
    %284 = vmatpush1.xpose.msra.mxu0 %v249
    %285 = vmatprep.subr.mxu0 0.0
    %286 = vmatpush1.xpose.msra.mxu0 %v250
    %287 = vmatprep.subr.mxu0 0.0
    %288 = vmatpush1.xpose.msra.mxu0 %v251
    %289 = vmatprep.subr.mxu0 0.0
    %290 = vmatpush1.xpose.msra.mxu0 0.0
    %291 = vmatprep.subr.mxu0 0.0
    %292 = vmatpush1.xpose.msra.mxu0 0.0
    %293 = vmatprep.subr.mxu0 0.0
    %294 = vmatpush1.xpose.msra.mxu0 0.0
    %295 = vmatprep.subr.mxu0 0.0
    %296 = vmatpush1.xpose.msra.mxu0 0.0
    %297 = vmatprep.subr.mxu0 0.0
    %298 = vmatpush1.xpose.msra.mxu0 0.0
    %299 = vmatprep.subr.mxu0 0.0
    %300 = vmatpush1.xpose.msra.mxu0 0.0
    %301 = vmatprep.subr.mxu0 0.0
    %302 = vmatpush1.xpose.msra.mxu0 0.0
    %303 = vmatprep.subr.mxu0 0.0
    %304 = vmatpush1.xpose.msra.mxu0 0.0
    %305 = vmatprep.subr.mxu0 0.0
    %306 = vmatpush1.xpose.msra.mxu0 0.0
    %307 = vmatprep.subr.mxu0 0.0
    %308 = vmatpush1.xpose.msra.mxu0 0.0
    %309 = vmatprep.subr.mxu0 0.0
    %310 = vmatpush1.xpose.msra.mxu0 0.0
    %311 = vmatprep.subr.mxu0 0.0
    %312 = vmatpush1.xpose.msra.mxu0 0.0
    %313 = vmatprep.subr.mxu0 0.0
    %314 = vmatpush1.xpose.msra.mxu0 0.0
    %315 = vmatprep.subr.mxu0 0.0
    %316 = vmatpush1.xpose.msra.mxu0 0.0
    %317 = vmatprep.subr.mxu0 0.0
    %318 = vmatpush1.xpose.msra.mxu0 0.0
    %319 = vmatprep.subr.mxu0 0.0
    %320 = vmatpush1.xpose.msra.mxu0 0.0
    %321 = vmatprep.mubr.f32.mxu0 0.0
    %322 = vmatmul.mubr.f32.gmra.mrb[0].mxu0 %v234
    %v323 = vpop.f32.mrb[0].mxu0
    %v324 = vadd.f32 %v256, %v323
    %v325 = vpop.f32.mrb[0].mxu0
    %326 = vdwg.mxu0
    %v327 = vmul.f32 %v324, 0.2
    %v328 = vmax.f32 %v324, %v327
    %s329 = scalar_lea.vmem [#allocation5], 384
    %v330 = vld [vmem:[%s329] sm:$0xff]
    %v331 = vld [vmem:[%s329 + $0x8] sm:$0xff]
    %v332 = vld [vmem:[%s329 + $0x10] sm:$0xff]
    %v333 = vld [vmem:[%s329 + $0x18] sm:$0xff]
    %v334 = vld [vmem:[%s329 + $0x20] sm:$0xff]
    %v335 = vld [vmem:[%s329 + $0x28] sm:$0xff]
    %v336 = vld [vmem:[%s329 + $0x30] sm:$0xff]
    %v337 = vld [vmem:[%s329 + $0x38] sm:$0xff]
    %v338 = vld [vmem:[%s329 + $0x40] sm:$0xff]
    %v339 = vld [vmem:[%s329 + $0x48] sm:$0xff]
    %v340 = vld [vmem:[%s329 + $0x50] sm:$0xff]
    %v341 = vld [vmem:[%s329 + $0x58] sm:$0xff]
    %v342 = vld [vmem:[%s329 + $0x60] sm:$0xff]
    %v343 = vld [vmem:[%s329 + $0x68] sm:$0xff]
    %v344 = vld [vmem:[%s329 + $0x70] sm:$0xff]
    %v345 = vld [vmem:[%s329 + $0x78] sm:$0xff]
    %v346 = vld [vmem:[%s2 + $0x3] sm:$0x1]
    %v347 = vlaneseq
    %v348 = vshrl.u32 %v347, 7
    %v349 = vsub.s32 0, %v348
    %v350 = vrot.slane %v346, %v349
    %351 = vmatprep.subr.mxu0 0.0
    %352 = vmatpush1.xpose.msra.mxu0 %v330
    %353 = vmatprep.subr.mxu0 0.0
    %354 = vmatpush1.xpose.msra.mxu0 %v331
    %355 = vmatprep.subr.mxu0 0.0
    %356 = vmatpush1.xpose.msra.mxu0 %v332
    %357 = vmatprep.subr.mxu0 0.0
    %358 = vmatpush1.xpose.msra.mxu0 %v333
    %359 = vmatprep.subr.mxu0 0.0
    %360 = vmatpush1.xpose.msra.mxu0 %v334
    %361 = vmatprep.subr.mxu0 0.0
    %362 = vmatpush1.xpose.msra.mxu0 %v335
    %363 = vmatprep.subr.mxu0 0.0
    %364 = vmatpush1.xpose.msra.mxu0 %v336
    %365 = vmatprep.subr.mxu0 0.0
    %366 = vmatpush1.xpose.msra.mxu0 %v337
    %367 = vmatprep.subr.mxu0 0.0
    %368 = vmatpush1.xpose.msra.mxu0 %v338
    %369 = vmatprep.subr.mxu0 0.0
    %370 = vmatpush1.xpose.msra.mxu0 %v339
    %371 = vmatprep.subr.mxu0 0.0
    %372 = vmatpush1.xpose.msra.mxu0 %v340
    %373 = vmatprep.subr.mxu0 0.0
    %374 = vmatpush1.xpose.msra.mxu0 %v341
    %375 = vmatprep.subr.mxu0 0.0
    %376 = vmatpush1.xpose.msra.mxu0 %v342
    %377 = vmatprep.subr.mxu0 0.0
    %378 = vmatpush1.xpose.msra.mxu0 %v343
    %379 = vmatprep.subr.mxu0 0.0
    %380 = vmatpush1.xpose.msra.mxu0 %v344
    %381 = vmatprep.subr.mxu0 0.0
    %382 = vmatpush1.xpose.msra.mxu0 %v345
    %383 = vmatprep.subr.mxu0 0.0
    %384 = vmatpush1.xpose.msra.mxu0 0.0
    %385 = vmatprep.subr.mxu0 0.0
    %386 = vmatpush1.xpose.msra.mxu0 0.0
    %387 = vmatprep.subr.mxu0 0.0
    %388 = vmatpush1.xpose.msra.mxu0 0.0
    %389 = vmatprep.subr.mxu0 0.0
    %390 = vmatpush1.xpose.msra.mxu0 0.0
    %391 = vmatprep.subr.mxu0 0.0
    %392 = vmatpush1.xpose.msra.mxu0 0.0
    %393 = vmatprep.subr.mxu0 0.0
    %394 = vmatpush1.xpose.msra.mxu0 0.0
    %395 = vmatprep.subr.mxu0 0.0
    %396 = vmatpush1.xpose.msra.mxu0 0.0
    %397 = vmatprep.subr.mxu0 0.0
    %398 = vmatpush1.xpose.msra.mxu0 0.0
    %399 = vmatprep.subr.mxu0 0.0
    %400 = vmatpush1.xpose.msra.mxu0 0.0
    %401 = vmatprep.subr.mxu0 0.0
    %402 = vmatpush1.xpose.msra.mxu0 0.0
    %403 = vmatprep.subr.mxu0 0.0
    %404 = vmatpush1.xpose.msra.mxu0 0.0
    %405 = vmatprep.subr.mxu0 0.0
    %406 = vmatpush1.xpose.msra.mxu0 0.0
    %407 = vmatprep.subr.mxu0 0.0
    %408 = vmatpush1.xpose.msra.mxu0 0.0
    %409 = vmatprep.subr.mxu0 0.0
    %410 = vmatpush1.xpose.msra.mxu0 0.0
    %411 = vmatprep.subr.mxu0 0.0
    %412 = vmatpush1.xpose.msra.mxu0 0.0
    %413 = vmatprep.subr.mxu0 0.0
    %414 = vmatpush1.xpose.msra.mxu0 0.0
    %415 = vmatprep.mubr.f32.mxu0 0.0
    %416 = vmatmul.mubr.f32.gmra.mrb[0].mxu0 %v328
    %v417 = vpop.f32.mrb[0].mxu0
    %v418 = vadd.f32 %v350, %v417
    %v419 = vpop.f32.mrb[0].mxu0
    %420 = vdwg.mxu0
    %v421 = vmul.f32 %v418, 0.2
    %v422 = vmax.f32 %v418, %v421
    %423 = vst [vmem:[#allocation7] sm:$0xff] %v422
    // Predicated region
    $region22: #{tpu_custom_call.1} parent=1 // pred_check
      _
    $region23: #{tpu_custom_call.1} parent=1 // pred_check_branch
      %425 = sbr.rel (0) target = $region25
    $region24: #{tpu_custom_call.1} parent=1 // pred_region
      %s427 = ssub.s32 128, 128
      %428 = vsyncadd [#allocation4], %s427
      %s430 = sshll.u32 [#allocation7], 4
      %s431 = int_to_ptr.vmem [resolvable:$true] %s430
      %433 = dma.vmem_to_hbm [thread:$0]  %s431, 128, %s3, [#allocation4]
    $region25: #{tpu_custom_call.1} parent=1 // pred_fallthru
      _
    // Predicated region
    $region26: #{tpu_custom_call.1} parent=1 // pred_check
      _
    $region27: #{tpu_custom_call.1} parent=1 // pred_check_branch
      %435 = sbr.rel (0) target = $region29
    $region28: #{tpu_custom_call.1} parent=1 // pred_region
      %436 = dma.done [#allocation4], 128
    $region29: #{tpu_custom_call.1} parent=1 // pred_fallthru
      _
    %437 = vsyncpa [#allocation3], 1
    %438 = vsyncpa [#allocation6], 1
    %439 = vsyncpa [#allocation4], 1

</llo_original>
